<compile_context>
chip_gen: v6e
topology: v6e:2x2x1
jax: 0.10.0
libtpu: 0.0.40
codegen_flags: <defaults>
</compile_context>

<pallas_src>
import math

import jax
import jax.numpy as jnp
from jax.experimental import pallas as pl
from jax.experimental.pallas import tpu as pltpu

EMBEDDING_SIZE = 512


def _round_up(x, m):
    return ((x + m - 1) // m) * m


def _linear_kernel(x_ref, w_ref, b_ref, o_ref):
    # x_ref: (TM, K)   one M-tile of flattened inputs, full K
    # w_ref: (K, N)    whole (already transposed) weight, constant across steps
    # b_ref: (1, N)    whole bias row (f32), broadcast over TM
    # o_ref: (TM, N)   full-width (lane-dense) output slab
    acc = jnp.dot(x_ref[...], w_ref[...], preferred_element_type=jnp.float32)
    o_ref[...] = (acc + b_ref[...]).astype(o_ref.dtype)


def embedding_forward(x, w_t, b, *, tile_m_max=2048, compute_dtype=None,
                      out_dtype=None):
    """x: [..., K]; w_t: [K, N] (transposed vs. PyTorch's [N, K]); b: [N] -> [..., N].

    compute_dtype: dtype fed to the MXU (e.g. jnp.bfloat16); f32 accumulation.
    out_dtype:     dtype stored to HBM (e.g. jnp.bfloat16 to halve writeback).
    Both default to x.dtype (exact nn.Linear semantics).
    """
    orig_shape = x.shape
    K = orig_shape[-1]
    M = int(math.prod(orig_shape[:-1])) if len(orig_shape) > 1 else 1
    N = w_t.shape[1]

    compute_dtype = x.dtype if compute_dtype is None else compute_dtype
    out_dtype = x.dtype if out_dtype is None else out_dtype

    x2d = x.reshape(M, K).astype(compute_dtype)
    w2d = w_t.astype(compute_dtype)
    b2d = b.reshape(1, N).astype(jnp.float32)  # bias added to the f32 accumulator

    # --- tile_m selection -------------------------------------------------
    # Keep tile_m a multiple of 8 (sublane rule) whenever we actually tile M.
    tile_m_max = max(8, _round_up(int(tile_m_max), 8))

    if M <= tile_m_max:
        num_tiles = 2 if M >= 512 else 1          # >=2 steps so v7x uses both TCs
    else:
        num_tiles = pl.cdiv(M, tile_m_max)
        if num_tiles % 2 == 1:                    # even split -> balanced 2-core shard
            num_tiles += 1

    if num_tiles == 1:
        tile_m = M                                # full-dim block: always legal
    else:
        tile_m = min(_round_up(pl.cdiv(M, num_tiles), 8), tile_m_max)

    grid_m = pl.cdiv(M, tile_m)

    # --- cost estimate (helps XLA overlap the custom call) -----------------
    bytes_accessed = (M * K * x2d.dtype.itemsize
                      + K * N * w2d.dtype.itemsize
                      + N * 4
                      + M * N * jnp.dtype(out_dtype).itemsize)
    cost = pl.CostEstimate(flops=2 * M * K * N,
                           bytes_accessed=bytes_accessed,
                           transcendentals=0)

    out = pl.pallas_call(
        _linear_kernel,
        out_shape=jax.ShapeDtypeStruct((M, N), out_dtype),
        grid_spec=pltpu.PrefetchScalarGridSpec(
            num_scalar_prefetch=0,
            grid=(grid_m,),
            in_specs=[
                pl.BlockSpec((tile_m, K), lambda i: (i, 0)),  # x: M-tile, full K
                pl.BlockSpec((K, N), lambda i: (0, 0)),       # weight: whole, constant
                pl.BlockSpec((1, N), lambda i: (0, 0)),       # bias: whole, constant
            ],
            out_specs=pl.BlockSpec((tile_m, N), lambda i: (i, 0)),
        ),
        compiler_params=pltpu.CompilerParams(
            # M-tiles are independent -> shard across TensorCores on v7x.
            dimension_semantics=("parallel",)),
        cost_estimate=cost,
    )(x2d, w2d, b2d)

    return out.reshape(*orig_shape[:-1], N)


if __name__ == "__main__":
    batch, seq, num_feature = 2, 8, 32

    key = jax.random.PRNGKey(0)
    kx, kw, kb = jax.random.split(key, 3)

    # Deterministic parameter init (mimics nn.Linear's uniform(-1/sqrt(K), 1/sqrt(K))).
    bound = 1.0 / jnp.sqrt(jnp.float32(num_feature))
    # PyTorch weight is [N, K]; we keep it transposed as [K, N] for the kernel.
    w_t = jax.random.uniform(kw, (num_feature, EMBEDDING_SIZE),
                             minval=-bound, maxval=bound, dtype=jnp.float32)
    b = jax.random.uniform(kb, (EMBEDDING_SIZE,),
                           minval=-bound, maxval=bound, dtype=jnp.float32)

    x = jax.random.normal(kx, (batch, seq, num_feature), dtype=jnp.float32)

    # Plain JAX reference (exact nn.Linear forward).
    ref = x @ w_t + b

    # 1) Exact-semantics f32 path.
    out_f32 = embedding_forward(x, w_t, b)
    jax.block_until_ready(out_f32)
    assert out_f32.shape == (batch, seq, EMBEDDING_SIZE)
    assert jnp.allclose(out_f32, ref, atol=1e-5, rtol=1e-5)

    # 2) Bandwidth-optimized bf16 operand / bf16 writeback path (f32 accumulate).
    out_bf16 = embedding_forward(x, w_t, b,
                                 compute_dtype=jnp.bfloat16,
                                 out_dtype=jnp.bfloat16)
    jax.block_until_ready(out_bf16)
    assert out_bf16.shape == (batch, seq, EMBEDDING_SIZE)
    assert out_bf16.dtype == jnp.bfloat16
    assert jnp.allclose(out_bf16.astype(jnp.float32), ref, atol=5e-2, rtol=5e-2)

    print("KERNEL_OK")
</pallas_src>

<mosaic_0001>
module attributes {stable_mosaic.version = 11 : i64} {
  func.func @_linear_kernel(%arg0: i32, %arg1: memref<16x32xf32, #tpu.memory_space<vmem>>, %arg2: memref<32x512xf32, #tpu.memory_space<vmem>>, %arg3: memref<1x512xf32, #tpu.memory_space<vmem>>, %arg4: memref<16x512xf32, #tpu.memory_space<vmem>>) attributes {dimension_semantics = [#tpu.dimension_semantics<parallel>], iteration_bounds = array<i64: 1>, scalar_prefetch = 0 : i64, scratch_operands = 0 : i64, tpu.core_type = #tpu.core_type<tc>, window_params = [{transform_indices = @transform_0, window_bounds = array<i64: 16, 32>}, {pipeline_mode = #tpu.pipeline_mode<synchronous>, transform_indices = @transform_1, window_bounds = array<i64: 32, 512>}, {pipeline_mode = #tpu.pipeline_mode<synchronous>, transform_indices = @transform_2, window_bounds = array<i64: 1, 512>}, {transform_indices = @transform_3, window_bounds = array<i64: 16, 512>}]} {
    %c0 = arith.constant 0 : index
    %c0_0 = arith.constant 0 : index
    %0 = vector.load %arg1[%c0, %c0_0] : memref<16x32xf32, #tpu.memory_space<vmem>>, vector<16x32xf32>
    %c0_1 = arith.constant 0 : index
    %c0_2 = arith.constant 0 : index
    %1 = vector.load %arg2[%c0_1, %c0_2] : memref<32x512xf32, #tpu.memory_space<vmem>>, vector<32x512xf32>
    %cst = arith.constant dense<0.000000e+00> : vector<16x512xf32>
    %2 = tpu.matmul %0, %1, %cst {dimension_numbers = #tpu.dot_dimension_numbers<[1], [0], [0], [1], [0, 0, 1, 1], [], []>} : vector<16x32xf32>, vector<32x512xf32>, vector<16x512xf32> -> vector<16x512xf32>
    %c0_3 = arith.constant 0 : index
    %c0_4 = arith.constant 0 : index
    %3 = vector.load %arg3[%c0_3, %c0_4] : memref<1x512xf32, #tpu.memory_space<vmem>>, vector<1x512xf32>
    %4 = vector.broadcast %3 : vector<1x512xf32> to vector<16x512xf32>
    %5 = arith.addf %2, %4 : vector<16x512xf32>
    %c0_5 = arith.constant 0 : index
    %c0_6 = arith.constant 0 : index
    %6 = vector.load %arg4[%c0_5, %c0_6] : memref<16x512xf32, #tpu.memory_space<vmem>>, vector<16x512xf32>
    tpu.vector_store %arg4[%c0_5, %c0_6], %5 {strides = array<i32>} : memref<16x512xf32, #tpu.memory_space<vmem>>, vector<16x512xf32>,
    return
  }
  func.func @transform_0(%arg0: i32) -> (i32, i32) {
    %c0_i32 = arith.constant 0 : i32
    %c0_i32_0 = arith.constant 0 : i32
    return %arg0, %c0_i32 : i32, i32
  }
  func.func @transform_1(%arg0: i32) -> (i32, i32) {
    %c0_i32 = arith.constant 0 : i32
    %c0_i32_0 = arith.constant 0 : i32
    %c0_i32_1 = arith.constant 0 : i32
    return %c0_i32, %c0_i32_0 : i32, i32
  }
  func.func @transform_2(%arg0: i32) -> (i32, i32) {
    %c0_i32 = arith.constant 0 : i32
    %c0_i32_0 = arith.constant 0 : i32
    %c0_i32_1 = arith.constant 0 : i32
    return %c0_i32, %c0_i32_0 : i32, i32
  }
  func.func @transform_3(%arg0: i32) -> (i32, i32) {
    %c0_i32 = arith.constant 0 : i32
    %c0_i32_0 = arith.constant 0 : i32
    return %arg0, %c0_i32 : i32, i32
  }
}

</mosaic_0001>

<llo_original>
// kernel: tpu_custom_call.1
$region0: #{tpu_custom_call.1}
  #allocation0 [shape = 'u32[]', space=smem, size = 0x4, offset = 0x4, fixed_abs, tag = 'smem constant byte address 0x4 - core index']
  #allocation1 [shape = 'u32[144,128]{1,0:T(1,128)}', space=vmem, size = 0x12000, scoped, tag = 'internal scratch']
  %s0 = inlined_call_operand.hbm [shape: f32[16,32], index: 0, kind: input, shape index: {}]
  %s1 = inlined_call_operand.hbm [shape: f32[32,512], index: 1, kind: input, shape index: {}]
  %s2 = inlined_call_operand.hbm [shape: f32[1,512], index: 2, kind: input, shape index: {}]
  %s3 = inlined_call_operand.hbm [shape: f32[16,512], index: 3, kind: output, shape index: {}]
  %s4 = sld [smem:[#allocation0]]
  $region34: #{tpu_custom_call.1} parent=0
    _
  %s6 = ssub.s32 1, %s4
  %s7 = scalar_select 0, %s6, %s4
  $region1: #{tpu_custom_call.1} parent=0
    #allocation2 [shape = 'u8[8192]{0}', space=vmem, size = 0x2000, scoped, tag = 'input window, operand 0, single buffered']
    #allocation3 [shape = 's32[1]{0}', space=sflag, size = 0x4, scoped, tag = 'scoped memory for tpu_custom_call.1']
    #allocation4 [shape = 's32[1]{0}', space=sflag, size = 0x4, scoped, tag = 'scoped memory for tpu_custom_call.1']
    #allocation5 [shape = 'u8[65536]{0}', space=vmem, size = 0x10000, scoped, tag = 'input window, operand 1, single buffered']
    #allocation6 [shape = 's32[1]{0}', space=sflag, size = 0x4, scoped, tag = 'scoped memory for tpu_custom_call.1']
    #allocation7 [shape = 'u8[2048]{0}', space=vmem, size = 0x800, scoped, tag = 'input window, operand 2, single buffered']
    #allocation8 [shape = 'u8[32768]{0}', space=vmem, size = 0x8000, scoped, tag = 'output window, operand 0, single buffered']
    %8 = vsyncpa [#allocation3], 0
    %9 = vsyncpa [#allocation6], 0
    %10 = vsyncpa [#allocation4], 0
    // Predicated region
    $region2: #{tpu_custom_call.1} parent=1 // pred_check
      _
    $region3: #{tpu_custom_call.1} parent=1 // pred_check_branch
      %12 = sbr.rel (0) target = $region5
    $region4: #{tpu_custom_call.1} parent=1 // pred_region
      %s14 = ssub.s32 256, 256
      %15 = vsyncadd [#allocation3], %s14
      %s16 = sshll.u32 [#allocation2], 4
      %s17 = int_to_ptr.vmem [resolvable:$true] %s16
      %22 = dma.hbm_to_vmem [thread:$0]  %s0, 256, %s17, [#allocation3], 128, 128, 8
    $region5: #{tpu_custom_call.1} parent=1 // pred_fallthru
      _
    // Predicated region
    $region6: #{tpu_custom_call.1} parent=1 // pred_check
      _
    $region7: #{tpu_custom_call.1} parent=1 // pred_check_branch
      %24 = sbr.rel (0) target = $region9
    $region8: #{tpu_custom_call.1} parent=1 // pred_region
      %s26 = ssub.s32 2048, 2048
      %27 = vsyncadd [#allocation6], %s26
      %s28 = sshll.u32 [#allocation5], 4
      %s29 = int_to_ptr.vmem [resolvable:$true] %s28
      %34 = dma.hbm_to_vmem [thread:$0]  %s1, 2048, %s29, [#allocation6], 512, 512, 32
    $region9: #{tpu_custom_call.1} parent=1 // pred_fallthru
      _
    // Predicated region
    $region10: #{tpu_custom_call.1} parent=1 // pred_check
      _
    $region11: #{tpu_custom_call.1} parent=1 // pred_check_branch
      %36 = sbr.rel (0) target = $region13
    $region12: #{tpu_custom_call.1} parent=1 // pred_region
      %s38 = ssub.s32 64, 64
      %39 = vsyncadd [#allocation6], %s38
      %s41 = sshll.u32 [#allocation7], 4
      %s42 = int_to_ptr.vmem [resolvable:$true] %s41
      %44 = dma.hbm_to_vmem [thread:$0]  %s2, 64, %s42, [#allocation6]
    $region13: #{tpu_custom_call.1} parent=1 // pred_fallthru
      _
    // Predicated region
    $region14: #{tpu_custom_call.1} parent=1 // pred_check
      _
    $region15: #{tpu_custom_call.1} parent=1 // pred_check_branch
      %46 = sbr.rel (0) target = $region17
    $region16: #{tpu_custom_call.1} parent=1 // pred_region
      %47 = dma.done [#allocation3], 256
    $region17: #{tpu_custom_call.1} parent=1 // pred_fallthru
      _
    // Predicated region
    $region18: #{tpu_custom_call.1} parent=1 // pred_check
      _
    $region19: #{tpu_custom_call.1} parent=1 // pred_check_branch
      %49 = sbr.rel (0) target = $region21
    $region20: #{tpu_custom_call.1} parent=1 // pred_region
      %50 = dma.done [#allocation6], 2048
    $region21: #{tpu_custom_call.1} parent=1 // pred_fallthru
      _
    // Predicated region
    $region22: #{tpu_custom_call.1} parent=1 // pred_check
      _
    $region23: #{tpu_custom_call.1} parent=1 // pred_check_branch
      %52 = sbr.rel (0) target = $region25
    $region24: #{tpu_custom_call.1} parent=1 // pred_region
      %53 = dma.done [#allocation6], 64
    $region25: #{tpu_custom_call.1} parent=1 // pred_fallthru
      _
    %v54 = vld [vmem:[#allocation2] sm:$0xff]
    %v55 = vld [vmem:[#allocation2 + $0x8] sm:$0xff]
    %v56 = vld [vmem:[#allocation5] sm:$0xff]
    %v57 = vld [vmem:[#allocation5 + $0x8] sm:$0xff]
    %v58 = vld [vmem:[#allocation5 + $0x10] sm:$0xff]
    %v59 = vld [vmem:[#allocation5 + $0x18] sm:$0xff]
    %v60 = vld [vmem:[#allocation5 + $0x20] sm:$0xff]
    %v61 = vld [vmem:[#allocation5 + $0x28] sm:$0xff]
    %v62 = vld [vmem:[#allocation5 + $0x30] sm:$0xff]
    %v63 = vld [vmem:[#allocation5 + $0x38] sm:$0xff]
    %v64 = vld [vmem:[#allocation5 + $0x40] sm:$0xff]
    %v65 = vld [vmem:[#allocation5 + $0x48] sm:$0xff]
    %v66 = vld [vmem:[#allocation5 + $0x50] sm:$0xff]
    %v67 = vld [vmem:[#allocation5 + $0x58] sm:$0xff]
    %v68 = vld [vmem:[#allocation5 + $0x60] sm:$0xff]
    %v69 = vld [vmem:[#allocation5 + $0x68] sm:$0xff]
    %v70 = vld [vmem:[#allocation5 + $0x70] sm:$0xff]
    %v71 = vld [vmem:[#allocation5 + $0x78] sm:$0xff]
    %v72 = vld [vmem:[#allocation7] sm:$0xf]
    %v74 = vlaneseq
    %v75 = vshrl.u32 %v74, 7
    %v76 = vsub.s32 0, %v75
    %v77 = vrot.slane %v72, %v76
    %v78 = vlaneseq
    %v79 = vshrl.u32 %v78, 7
    %v80 = vsub.s32 1, %v79
    %v81 = vrot.slane %v72, %v80
    %v82 = vlaneseq
    %v83 = vshrl.u32 %v82, 7
    %v84 = vsub.s32 2, %v83
    %v85 = vrot.slane %v72, %v84
    %v86 = vlaneseq
    %v87 = vshrl.u32 %v86, 7
    %v88 = vsub.s32 3, %v87
    %v89 = vrot.slane %v72, %v88
    %vm94 = vcmask 261120
    %v96 = vsel %vm94, %v54, 0
    %v99 = vsel %vm94, %v55, 0
    %101 = vmatprep.subr.mxu0 0.0
    %102 = vmatpush1.msra.mxu0 0.0
    %103 = vmatprep.subr.mxu0 0.0
    %104 = vmatpush1.msra.mxu0 0.0
    %105 = vmatprep.subr.mxu0 0.0
    %106 = vmatpush1.msra.mxu0 0.0
    %107 = vmatprep.subr.mxu0 0.0
    %108 = vmatpush1.msra.mxu0 0.0
    %109 = vmatprep.subr.mxu0 0.0
    %110 = vmatpush1.msra.mxu0 0.0
    %111 = vmatprep.subr.mxu0 0.0
    %112 = vmatpush1.msra.mxu0 0.0
    %113 = vmatprep.subr.mxu0 0.0
    %114 = vmatpush1.msra.mxu0 0.0
    %115 = vmatprep.subr.mxu0 0.0
    %116 = vmatpush1.msra.mxu0 0.0
    %117 = vmatprep.subr.mxu0 0.0
    %118 = vmatpush1.msra.mxu0 0.0
    %119 = vmatprep.subr.mxu0 0.0
    %120 = vmatpush1.msra.mxu0 0.0
    %121 = vmatprep.subr.mxu0 0.0
    %122 = vmatpush1.msra.mxu0 0.0
    %123 = vmatprep.subr.mxu0 0.0
    %124 = vmatpush1.msra.mxu0 0.0
    %125 = vmatprep.subr.mxu0 %v69
    %126 = vmatpush1.msra.mxu0 %v68
    %127 = vmatprep.subr.mxu0 %v65
    %128 = vmatpush1.msra.mxu0 %v64
    %129 = vmatprep.subr.mxu0 %v61
    %130 = vmatpush1.msra.mxu0 %v60
    %131 = vmatprep.subr.mxu0 %v57
    %132 = vmatpush1.msra.mxu0 %v56
    %133 = vmatprep.subr.mxu0 0.0
    %134 = vmatpush2.msra.mxu0 0.0
    %135 = vmatprep.subr.mxu0 0.0
    %136 = vmatpush2.msra.mxu0 0.0
    %137 = vmatprep.subr.mxu0 0.0
    %138 = vmatpush2.msra.mxu0 0.0
    %139 = vmatprep.subr.mxu0 0.0
    %140 = vmatpush2.msra.mxu0 0.0
    %141 = vmatprep.subr.mxu0 0.0
    %142 = vmatpush2.msra.mxu0 0.0
    %143 = vmatprep.subr.mxu0 0.0
    %144 = vmatpush2.msra.mxu0 0.0
    %145 = vmatprep.subr.mxu0 0.0
    %146 = vmatpush2.msra.mxu0 0.0
    %147 = vmatprep.subr.mxu0 0.0
    %148 = vmatpush2.msra.mxu0 0.0
    %149 = vmatprep.subr.mxu0 0.0
    %150 = vmatpush2.msra.mxu0 0.0
    %151 = vmatprep.subr.mxu0 0.0
    %152 = vmatpush2.msra.mxu0 0.0
    %153 = vmatprep.subr.mxu0 0.0
    %154 = vmatpush2.msra.mxu0 0.0
    %155 = vmatprep.subr.mxu0 0.0
    %156 = vmatpush2.msra.mxu0 0.0
    %157 = vmatprep.subr.mxu0 0.0
    %158 = vmatpush2.msra.mxu0 0.0
    %159 = vmatprep.subr.mxu0 0.0
    %160 = vmatpush2.msra.mxu0 0.0
    %161 = vmatprep.subr.mxu0 0.0
    %162 = vmatpush2.msra.mxu0 0.0
    %163 = vmatprep.subr.mxu0 0.0
    %164 = vmatpush2.msra.mxu0 0.0
    %165 = vmatprep.mubr.f32.mxu0 0.0
    %166 = vmatmul.mubr.f32.gmra.mxu0 %v96
    %v167 = vpop.f32.mrf.mxu0
    %v168 = vadd.f32 %v77, %v167
    %v169 = vpop.f32.mrf.mxu0
    %v170 = vadd.f32 %v81, %v169
    %171 = vmatprep.mubr.f32.mxu0 0.0
    %172 = vmatmul.mubr.f32.gmra.mxu0 %v99
    %v173 = vpop.f32.mrf.mxu0
    %v174 = vadd.f32 %v77, %v173
    %v175 = vpop.f32.mrf.mxu0
    %v176 = vadd.f32 %v81, %v175
    %177 = vdwg.mxu0
    %178 = vmatprep.subr.mxu0 0.0
    %179 = vmatpush1.msra.mxu0 0.0
    %180 = vmatprep.subr.mxu0 0.0
    %181 = vmatpush1.msra.mxu0 0.0
    %182 = vmatprep.subr.mxu0 0.0
    %183 = vmatpush1.msra.mxu0 0.0
    %184 = vmatprep.subr.mxu0 0.0
    %185 = vmatpush1.msra.mxu0 0.0
    %186 = vmatprep.subr.mxu0 0.0
    %187 = vmatpush1.msra.mxu0 0.0
    %188 = vmatprep.subr.mxu0 0.0
    %189 = vmatpush1.msra.mxu0 0.0
    %190 = vmatprep.subr.mxu0 0.0
    %191 = vmatpush1.msra.mxu0 0.0
    %192 = vmatprep.subr.mxu0 0.0
    %193 = vmatpush1.msra.mxu0 0.0
    %194 = vmatprep.subr.mxu0 0.0
    %195 = vmatpush1.msra.mxu0 0.0
    %196 = vmatprep.subr.mxu0 0.0
    %197 = vmatpush1.msra.mxu0 0.0
    %198 = vmatprep.subr.mxu0 0.0
    %199 = vmatpush1.msra.mxu0 0.0
    %200 = vmatprep.subr.mxu0 0.0
    %201 = vmatpush1.msra.mxu0 0.0
    %202 = vmatprep.subr.mxu0 %v71
    %203 = vmatpush1.msra.mxu0 %v70
    %204 = vmatprep.subr.mxu0 %v67
    %205 = vmatpush1.msra.mxu0 %v66
    %206 = vmatprep.subr.mxu0 %v63
    %207 = vmatpush1.msra.mxu0 %v62
    %208 = vmatprep.subr.mxu0 %v59
    %209 = vmatpush1.msra.mxu0 %v58
    %210 = vmatprep.subr.mxu0 0.0
    %211 = vmatpush2.msra.mxu0 0.0
    %212 = vmatprep.subr.mxu0 0.0
    %213 = vmatpush2.msra.mxu0 0.0
    %214 = vmatprep.subr.mxu0 0.0
    %215 = vmatpush2.msra.mxu0 0.0
    %216 = vmatprep.subr.mxu0 0.0
    %217 = vmatpush2.msra.mxu0 0.0
    %218 = vmatprep.subr.mxu0 0.0
    %219 = vmatpush2.msra.mxu0 0.0
    %220 = vmatprep.subr.mxu0 0.0
    %221 = vmatpush2.msra.mxu0 0.0
    %222 = vmatprep.subr.mxu0 0.0
    %223 = vmatpush2.msra.mxu0 0.0
    %224 = vmatprep.subr.mxu0 0.0
    %225 = vmatpush2.msra.mxu0 0.0
    %226 = vmatprep.subr.mxu0 0.0
    %227 = vmatpush2.msra.mxu0 0.0
    %228 = vmatprep.subr.mxu0 0.0
    %229 = vmatpush2.msra.mxu0 0.0
    %230 = vmatprep.subr.mxu0 0.0
    %231 = vmatpush2.msra.mxu0 0.0
    %232 = vmatprep.subr.mxu0 0.0
    %233 = vmatpush2.msra.mxu0 0.0
    %234 = vmatprep.subr.mxu0 0.0
    %235 = vmatpush2.msra.mxu0 0.0
    %236 = vmatprep.subr.mxu0 0.0
    %237 = vmatpush2.msra.mxu0 0.0
    %238 = vmatprep.subr.mxu0 0.0
    %239 = vmatpush2.msra.mxu0 0.0
    %240 = vmatprep.subr.mxu0 0.0
    %241 = vmatpush2.msra.mxu0 0.0
    %242 = vmatprep.mubr.f32.mxu0 0.0
    %243 = vmatmul.mubr.f32.gmra.mxu0 %v96
    %v244 = vpop.f32.mrf.mxu0
    %v245 = vadd.f32 %v85, %v244
    %v246 = vpop.f32.mrf.mxu0
    %v247 = vadd.f32 %v89, %v246
    %248 = vmatprep.mubr.f32.mxu0 0.0
    %249 = vmatmul.mubr.f32.gmra.mxu0 %v99
    %v250 = vpop.f32.mrf.mxu0
    %v251 = vadd.f32 %v85, %v250
    %v252 = vpop.f32.mrf.mxu0
    %v253 = vadd.f32 %v89, %v252
    %254 = vdwg.mxu0
    %255 = vst [vmem:[#allocation8] sm:$0xff] %v168
    %256 = vst [vmem:[#allocation8 + $0x8] sm:$0xff] %v170
    %257 = vst [vmem:[#allocation8 + $0x10] sm:$0xff] %v245
    %258 = vst [vmem:[#allocation8 + $0x18] sm:$0xff] %v247
    %259 = vst [vmem:[#allocation8 + $0x20] sm:$0xff] %v174
    %260 = vst [vmem:[#allocation8 + $0x28] sm:$0xff] %v176
    %261 = vst [vmem:[#allocation8 + $0x30] sm:$0xff] %v251
    %262 = vst [vmem:[#allocation8 + $0x38] sm:$0xff] %v253
    // Predicated region
    $region26: #{tpu_custom_call.1} parent=1 // pred_check
      _
    $region27: #{tpu_custom_call.1} parent=1 // pred_check_branch
      %264 = sbr.rel (0) target = $region29
    $region28: #{tpu_custom_call.1} parent=1 // pred_region
      %s266 = ssub.s32 1024, 1024
      %267 = vsyncadd [#allocation4], %s266
      %s268 = sshll.u32 [#allocation8], 4
      %s269 = int_to_ptr.vmem [resolvable:$true] %s268
      %274 = dma.vmem_to_hbm [thread:$0]  %s269, 1024, %s3, [#allocation4], 512, 512, 32
    $region29: #{tpu_custom_call.1} parent=1 // pred_fallthru
      _
    // Predicated region
    $region30: #{tpu_custom_call.1} parent=1 // pred_check
      _
    $region31: #{tpu_custom_call.1} parent=1 // pred_check_branch
      %276 = sbr.rel (0) target = $region33
    $region32: #{tpu_custom_call.1} parent=1 // pred_region
      %277 = dma.done [#allocation4], 1024
    $region33: #{tpu_custom_call.1} parent=1 // pred_fallthru
      _
    %278 = vsyncpa [#allocation3], 1
    %279 = vsyncpa [#allocation6], 1
    %280 = vsyncpa [#allocation4], 1

</llo_original>
